<compile_context>
chip_gen: v6e
topology: v6e:2x2x1
jax: 0.10.0
libtpu: 0.0.40
codegen_flags: <defaults>
</compile_context>

<pallas_src>
import jax
import jax.numpy as jnp
from jax.experimental import pallas as pl
from jax.experimental.pallas import tpu as pltpu

TEMPERATURE = 0.1            # matches the module default
INV_TEMPERATURE = 1.0 / TEMPERATURE


def nt_xent_kernel(x_ref, w_ref, b_ref, loss_ref):
    """Fused projection + task-head + NT-Xent contrastive loss.

    x_ref    : (2B, C*H*W) bf16  flattened, pretreated views
    w_ref    : (C*H*W, 256) bf16 fused backbone-projection @ task-head weight
    b_ref    : (1, 256) f32      task-head bias
    loss_ref : (1, 128) f32      lane-dense output slab; loss broadcast to lanes
    """
    # ---- projection: single full-width MXU matmul, bf16 in / f32 accumulate ----
    out = jnp.dot(x_ref[...], w_ref[...],
                  preferred_element_type=jnp.float32) + b_ref[...]

    n = out.shape[0]
    half = n // 2

    # ---- row-wise L2 normalize (F.normalize, eps=1e-12) via rsqrt ----
    # Per-row, so normalizing `out` whole equals normalizing the two halves
    # separately and concatenating.
    sumsq = jnp.sum(out * out, axis=-1, keepdims=True)
    o = out * jax.lax.rsqrt(jnp.maximum(sumsq, 1e-24))

    # ---- positives: exactly the reference's sum(aug1 * aug2, dim=-1) ----
    # The reference duplicates this vector for both halves, so its mean over
    # all n rows equals its mean over the n/2 pairs -> no concat needed.
    pos_half = jnp.sum(o[:half] * o[half:], axis=-1, keepdims=True)   # (n/2, 1)
    mean_pos = jnp.mean(pos_half)

    # ---- similarity: o @ o.T (no explicit transpose), consumed straight into
    # the max-shifted exp so only one (n, n) f32 buffer is live.
    sim = jax.lax.dot_general(o, o, (((1,), (1,)), ((), ())),
                              preferred_element_type=jnp.float32)
    scaled = jnp.exp((sim - 1.0) * INV_TEMPERATURE)        # all entries <= ~1

    # ---- negatives: row sum minus the diagonal.  Rows are unit-norm, so the
    # shifted diagonal is exp(0) = 1 -> subtract the constant (no ~eye mask).
    neg_shifted = jnp.sum(scaled, axis=-1, keepdims=True) - 1.0        # (n, 1)

    # ---- NT-Xent in the log domain, max-shift folded back exactly:
    #   loss = mean(log(neg) - sim_pos/T),  log(neg) = 1/T + log(neg_shifted)
    loss = jnp.mean(jnp.log(neg_shifted)) + (1.0 - mean_pos) * INV_TEMPERATURE

    # Lane-dense scalar output (unmasked vector store); wrapper reads [0, 0].
    loss_ref[...] = jnp.broadcast_to(loss, (1, 128)).astype(jnp.float32)


def contrastive_forward(treated, w_bb, w_th, b_th):
    """treated: (2B, C, H, W) pretreated views in [0, 1]. Returns scalar loss."""
    n = treated.shape[0]
    chw = treated.shape[1] * treated.shape[2] * treated.shape[3]
    d = w_th.shape[1]

    # bf16 MXU operands (f32 accumulation inside the kernel).
    x_flat = treated.reshape(n, chw).astype(jnp.bfloat16)
    # Fuse the stand-in linear backbone with the task-head weight: there is no
    # nonlinearity between them, and E=32 would leave the MXU at <=25% lane
    # utilization if kept as two separate matmuls.
    w_fused = jnp.dot(w_bb, w_th,
                      preferred_element_type=jnp.float32).astype(jnp.bfloat16)

    vmem_spec = pl.BlockSpec(memory_space=pltpu.MemorySpace.VMEM)
    cost = pl.CostEstimate(
        flops=2 * n * chw * d + 2 * n * n * d + 8 * n * n,
        transcendentals=n * n + 3 * n,
        bytes_accessed=(n * chw * 2) + (chw * d * 2) + (d * 4) + (128 * 4),
    )

    out = pl.pallas_call(
        nt_xent_kernel,
        out_shape=jax.ShapeDtypeStruct((1, 128), jnp.float32),
        in_specs=[vmem_spec, vmem_spec, vmem_spec],
        out_specs=vmem_spec,
        cost_estimate=cost,
        compiler_params=pltpu.CompilerParams(
            vmem_limit_bytes=32 * 1024 * 1024),
    )(x_flat, w_fused, b_th)
    return out[0, 0]


if __name__ == "__main__":
    key = jax.random.PRNGKey(0)
    k1, k2, k3, k4 = jax.random.split(key, 4)

    # Small shapes consistent with the module's forward.
    B, C, H, W = 2, 4, 16, 16   # images: (batch, channels, height, width), NCHW
    E = 32                      # embed_features
    D = 256                     # task_head output dim (fixed by the module)

    # Raw uint8-like images in [0, 255].
    x = jax.random.uniform(k1, (B, C, H, W), jnp.float32, 0.0, 255.0)

    # ---- pretreat (glue): scale to [0, 1] and build the two views ----
    # TODO(synk): the random augmentations (horizontal flip / crop / color
    # distortion / gaussian blur) are stochastic numpy ops from an external
    # `da` module; identity views are used here instead.
    view = x / 255.0
    treated = jnp.concatenate([view, view], axis=0)            # (2B, C, H, W)

    # ---- backbone params (glue): stand-in linear projection ----
    # TODO(synk): the real backbone is an arbitrary user-supplied nn.Module; a
    # single linear projection over flattened pixels is used as a stand-in and
    # fused with the task-head weight in the wrapper.
    w_bb = jax.random.normal(k2, (C * H * W, E), jnp.float32) * 0.02

    # ---- task head params: Linear(embed_features, 256), deterministic init ----
    w_th = jax.random.normal(k3, (E, D), jnp.float32) * 0.05
    b_th = jax.random.normal(k4, (1, D), jnp.float32) * 0.01

    loss = contrastive_forward(treated, w_bb, w_th, b_th)
    jax.block_until_ready(loss)
    print("KERNEL_OK")
</pallas_src>

<mosaic_0001>
module attributes {stable_mosaic.version = 11 : i64} {
  func.func @nt_xent_kernel(%arg0: memref<4x1024xbf16, #tpu.memory_space<vmem>>, %arg1: memref<1024x256xbf16, #tpu.memory_space<vmem>>, %arg2: memref<1x256xf32, #tpu.memory_space<vmem>>, %arg3: memref<1x128xf32, #tpu.memory_space<vmem>>) attributes {dimension_semantics = [], scalar_prefetch = 0 : i64, scratch_operands = 0 : i64, tpu.core_type = #tpu.core_type<tc>} {
    %c0 = arith.constant 0 : index
    %c0_0 = arith.constant 0 : index
    %0 = vector.load %arg0[%c0, %c0_0] : memref<4x1024xbf16, #tpu.memory_space<vmem>>, vector<4x1024xbf16>
    %c0_1 = arith.constant 0 : index
    %c0_2 = arith.constant 0 : index
    %1 = vector.load %arg1[%c0_1, %c0_2] : memref<1024x256xbf16, #tpu.memory_space<vmem>>, vector<1024x256xbf16>
    %cst = arith.constant dense<0.000000e+00> : vector<4x256xf32>
    %2 = tpu.matmul %0, %1, %cst {dimension_numbers = #tpu.dot_dimension_numbers<[1], [0], [0], [1], [0, 0, 1, 1], [], []>} : vector<4x1024xbf16>, vector<1024x256xbf16>, vector<4x256xf32> -> vector<4x256xf32>
    %c0_3 = arith.constant 0 : index
    %c0_4 = arith.constant 0 : index
    %3 = vector.load %arg2[%c0_3, %c0_4] : memref<1x256xf32, #tpu.memory_space<vmem>>, vector<1x256xf32>
    %4 = vector.broadcast %3 : vector<1x256xf32> to vector<4x256xf32>
    %5 = arith.addf %2, %4 : vector<4x256xf32>
    %6 = arith.mulf %5, %5 : vector<4x256xf32>
    %cst_5 = arith.constant dense<0.000000e+00> : vector<4xf32>
    %7 = vector.multi_reduction <add>, %6, %cst_5 [1] : vector<4x256xf32> to vector<4xf32>
    %8 = vector.shape_cast %7 : vector<4xf32> to vector<4x1xf32>
    %cst_6 = arith.constant 1.000000e-24 : f32
    %9 = vector.broadcast %cst_6 : f32 to vector<4x1xf32>
    %10 = arith.maximumf %8, %9 : vector<4x1xf32>
    %11 = math.rsqrt %10 : vector<4x1xf32>
    %12 = vector.broadcast %11 : vector<4x1xf32> to vector<4x256xf32>
    %13 = arith.mulf %5, %12 : vector<4x256xf32>
    %14 = vector.extract_strided_slice %13 {offsets = [0, 0], sizes = [2, 256], strides = [1, 1]} : vector<4x256xf32> to vector<2x256xf32>
    %15 = vector.extract_strided_slice %13 {offsets = [2, 0], sizes = [2, 256], strides = [1, 1]} : vector<4x256xf32> to vector<2x256xf32>
    %16 = arith.mulf %14, %15 : vector<2x256xf32>
    %cst_7 = arith.constant dense<0.000000e+00> : vector<2xf32>
    %17 = vector.multi_reduction <add>, %16, %cst_7 [1] : vector<2x256xf32> to vector<2xf32>
    %18 = vector.shape_cast %17 : vector<2xf32> to vector<2x1xf32>
    %19 = vector.shape_cast %18 : vector<2x1xf32> to vector<1x2x1xf32>
    %cst_8 = arith.constant dense<0.000000e+00> : vector<1xf32>
    %20 = vector.multi_reduction <add>, %19, %cst_8 [1, 2] : vector<1x2x1xf32> to vector<1xf32>
    %21 = vector.shape_cast %20 : vector<1xf32> to vector<1x1x1xf32>
    %22 = vector.extract %21[0, 0, 0] : f32 from vector<1x1x1xf32>
    %cst_9 = arith.constant 2.000000e+00 : f32
    %23 = arith.divf %22, %cst_9 : f32
    %cst_10 = arith.constant dense<0.000000e+00> : vector<4x4xf32>
    %24 = tpu.matmul %13, %13, %cst_10 {dimension_numbers = #tpu.dot_dimension_numbers<[1], [1], [0], [0], [0, 0, 1, 0], [], []>} : vector<4x256xf32>, vector<4x256xf32>, vector<4x4xf32> -> vector<4x4xf32>
    %cst_11 = arith.constant 1.000000e+00 : f32
    %25 = vector.broadcast %cst_11 : f32 to vector<4x4xf32>
    %26 = arith.subf %24, %25 : vector<4x4xf32>
    %cst_12 = arith.constant 1.000000e+01 : f32
    %27 = vector.broadcast %cst_12 : f32 to vector<4x4xf32>
    %28 = arith.mulf %26, %27 : vector<4x4xf32>
    %29 = math.exp %28 : vector<4x4xf32>
    %cst_13 = arith.constant dense<0.000000e+00> : vector<4xf32>
    %30 = vector.multi_reduction <add>, %29, %cst_13 [1] : vector<4x4xf32> to vector<4xf32>
    %31 = vector.shape_cast %30 : vector<4xf32> to vector<4x1xf32>
    %cst_14 = arith.constant 1.000000e+00 : f32
    %32 = vector.broadcast %cst_14 : f32 to vector<4x1xf32>
    %33 = arith.subf %31, %32 : vector<4x1xf32>
    %34 = math.log %33 : vector<4x1xf32>
    %35 = vector.shape_cast %34 : vector<4x1xf32> to vector<1x4x1xf32>
    %cst_15 = arith.constant dense<0.000000e+00> : vector<1xf32>
    %36 = vector.multi_reduction <add>, %35, %cst_15 [1, 2] : vector<1x4x1xf32> to vector<1xf32>
    %37 = vector.shape_cast %36 : vector<1xf32> to vector<1x1x1xf32>
    %38 = vector.extract %37[0, 0, 0] : f32 from vector<1x1x1xf32>
    %cst_16 = arith.constant 4.000000e+00 : f32
    %39 = arith.divf %38, %cst_16 : f32
    %cst_17 = arith.constant 1.000000e+00 : f32
    %40 = arith.subf %cst_17, %23 : f32
    %cst_18 = arith.constant 1.000000e+01 : f32
    %41 = arith.mulf %40, %cst_18 : f32
    %42 = arith.addf %39, %41 : f32
    %43 = vector.broadcast %42 : f32 to vector<1x128xf32>
    %c0_19 = arith.constant 0 : index
    %c0_20 = arith.constant 0 : index
    %44 = vector.load %arg3[%c0_19, %c0_20] : memref<1x128xf32, #tpu.memory_space<vmem>>, vector<1x128xf32>
    tpu.vector_store %arg3[%c0_19, %c0_20], %43 {strides = array<i32>} : memref<1x128xf32, #tpu.memory_space<vmem>>, vector<1x128xf32>,
    return
  }
}

</mosaic_0001>

<llo_original>
// kernel: tpu_custom_call.1
$region0: #{tpu_custom_call.1}
  #allocation0 [shape = 'u32[]', space=smem, size = 0x4, offset = 0x4, fixed_abs, tag = 'smem constant byte address 0x4 - core index']
  #allocation1 [shape = 'u32[144,128]{1,0:T(1,128)}', space=vmem, size = 0x12000, scoped, tag = 'internal scratch']
  %s0 = inlined_call_operand.hbm [shape: bf16[4,1024], index: 0, kind: input, shape index: {}]
  %s1 = inlined_call_operand.hbm [shape: bf16[1024,256], index: 1, kind: input, shape index: {}]
  %s2 = inlined_call_operand.vmem [shape: f32[1,256], index: 2, kind: input, shape index: {}]
  %s3 = inlined_call_operand.hbm [shape: f32[1,128], index: 3, kind: output, shape index: {}]
  %s4 = sld [smem:[#allocation0]]
  $region30: #{tpu_custom_call.1} parent=0
    _
  %s6 = ssub.s32 1, %s4
  %s7 = scalar_select 0, %s6, %s4
  $region1: #{tpu_custom_call.1} parent=0
    #allocation2 [shape = 'u8[8192]{0}', space=vmem, size = 0x2000, scoped, tag = 'input window, operand 0, single buffered']
    #allocation3 [shape = 's32[1]{0}', space=sflag, size = 0x4, scoped, tag = 'scoped memory for tpu_custom_call.1']
    #allocation4 [shape = 's32[1]{0}', space=sflag, size = 0x4, scoped, tag = 'scoped memory for tpu_custom_call.1']
    #allocation5 [shape = 'u8[524288]{0}', space=vmem, size = 0x80000, scoped, tag = 'input window, operand 1, single buffered']
    #allocation6 [shape = 's32[1]{0}', space=sflag, size = 0x4, scoped, tag = 'scoped memory for tpu_custom_call.1']
    #allocation7 [shape = 'u8[512]{0}', space=vmem, size = 0x400, scoped, tag = 'output window, operand 0, single buffered']
    %8 = vsyncpa [#allocation3], 0
    %9 = vsyncpa [#allocation6], 0
    %10 = vsyncpa [#allocation4], 0
    // Predicated region
    $region2: #{tpu_custom_call.1} parent=1 // pred_check
      _
    $region3: #{tpu_custom_call.1} parent=1 // pred_check_branch
      %12 = sbr.rel (0) target = $region5
    $region4: #{tpu_custom_call.1} parent=1 // pred_region
      %s14 = ssub.s32 256, 256
      %15 = vsyncadd [#allocation3], %s14
      %s17 = sshll.u32 [#allocation2], 4
      %s18 = int_to_ptr.vmem [resolvable:$true] %s17
      %20 = dma.hbm_to_vmem [thread:$0]  %s0, 256, %s18, [#allocation3]
    $region5: #{tpu_custom_call.1} parent=1 // pred_fallthru
      _
    // Predicated region
    $region6: #{tpu_custom_call.1} parent=1 // pred_check
      _
    $region7: #{tpu_custom_call.1} parent=1 // pred_check_branch
      %22 = sbr.rel (0) target = $region9
    $region8: #{tpu_custom_call.1} parent=1 // pred_region
      %s24 = ssub.s32 16384, 16384
      %25 = vsyncadd [#allocation6], %s24
      %s26 = sshll.u32 [#allocation5], 4
      %s27 = int_to_ptr.vmem [resolvable:$true] %s26
      %32 = dma.hbm_to_vmem [thread:$0]  %s1, 16384, %s27, [#allocation6], 128, 128, 8
    $region9: #{tpu_custom_call.1} parent=1 // pred_fallthru
      _
    // Predicated region
    $region10: #{tpu_custom_call.1} parent=1 // pred_check
      _
    $region11: #{tpu_custom_call.1} parent=1 // pred_check_branch
      %34 = sbr.rel (0) target = $region13
    $region12: #{tpu_custom_call.1} parent=1 // pred_region
      _
    $region13: #{tpu_custom_call.1} parent=1 // pred_fallthru
      _
    // Predicated region
    $region14: #{tpu_custom_call.1} parent=1 // pred_check
      _
    $region15: #{tpu_custom_call.1} parent=1 // pred_check_branch
      %36 = sbr.rel (0) target = $region17
    $region16: #{tpu_custom_call.1} parent=1 // pred_region
      %37 = dma.done [#allocation3], 256
    $region17: #{tpu_custom_call.1} parent=1 // pred_fallthru
      _
    // Predicated region
    $region18: #{tpu_custom_call.1} parent=1 // pred_check
      _
    $region19: #{tpu_custom_call.1} parent=1 // pred_check_branch
      %39 = sbr.rel (0) target = $region21
    $region20: #{tpu_custom_call.1} parent=1 // pred_region
      %40 = dma.done [#allocation6], 16384
    $region21: #{tpu_custom_call.1} parent=1 // pred_fallthru
      _
    %v41 = vld [vmem:[#allocation2] sm:$0xff]
    %v42 = vld [vmem:[#allocation2 + $0x8] sm:$0xff]
    %v43 = vld [vmem:[#allocation5] sm:$0xff]
    %v44 = vld [vmem:[#allocation5 + $0x8] sm:$0xff]
    %v45 = vld [vmem:[#allocation5 + $0x10] sm:$0xff]
    %v46 = vld [vmem:[#allocation5 + $0x18] sm:$0xff]
    %v47 = vld [vmem:[#allocation5 + $0x20] sm:$0xff]
    %v48 = vld [vmem:[#allocation5 + $0x28] sm:$0xff]
    %v49 = vld [vmem:[#allocation5 + $0x30] sm:$0xff]
    %v50 = vld [vmem:[#allocation5 + $0x38] sm:$0xff]
    %v51 = vld [vmem:[#allocation5 + $0x40] sm:$0xff]
    %v52 = vld [vmem:[#allocation5 + $0x48] sm:$0xff]
    %v53 = vld [vmem:[#allocation5 + $0x50] sm:$0xff]
    %v54 = vld [vmem:[#allocation5 + $0x58] sm:$0xff]
    %v55 = vld [vmem:[#allocation5 + $0x60] sm:$0xff]
    %v56 = vld [vmem:[#allocation5 + $0x68] sm:$0xff]
    %v57 = vld [vmem:[#allocation5 + $0x70] sm:$0xff]
    %v58 = vld [vmem:[#allocation5 + $0x78] sm:$0xff]
    %v59 = vld [vmem:[#allocation5 + $0x80] sm:$0xff]
    %v60 = vld [vmem:[#allocation5 + $0x88] sm:$0xff]
    %v61 = vld [vmem:[#allocation5 + $0x90] sm:$0xff]
    %v62 = vld [vmem:[#allocation5 + $0x98] sm:$0xff]
    %v63 = vld [vmem:[#allocation5 + $0xa0] sm:$0xff]
    %v64 = vld [vmem:[#allocation5 + $0xa8] sm:$0xff]
    %v65 = vld [vmem:[#allocation5 + $0xb0] sm:$0xff]
    %v66 = vld [vmem:[#allocation5 + $0xb8] sm:$0xff]
    %v67 = vld [vmem:[#allocation5 + $0xc0] sm:$0xff]
    %v68 = vld [vmem:[#allocation5 + $0xc8] sm:$0xff]
    %v69 = vld [vmem:[#allocation5 + $0xd0] sm:$0xff]
    %v70 = vld [vmem:[#allocation5 + $0xd8] sm:$0xff]
    %v71 = vld [vmem:[#allocation5 + $0xe0] sm:$0xff]
    %v72 = vld [vmem:[#allocation5 + $0xe8] sm:$0xff]
    %v73 = vld [vmem:[#allocation5 + $0xf0] sm:$0xff]
    %v74 = vld [vmem:[#allocation5 + $0xf8] sm:$0xff]
    %v75 = vld [vmem:[#allocation5 + $0x100] sm:$0xff]
    %v76 = vld [vmem:[#allocation5 + $0x108] sm:$0xff]
    %v77 = vld [vmem:[#allocation5 + $0x110] sm:$0xff]
    %v78 = vld [vmem:[#allocation5 + $0x118] sm:$0xff]
    %v79 = vld [vmem:[#allocation5 + $0x120] sm:$0xff]
    %v80 = vld [vmem:[#allocation5 + $0x128] sm:$0xff]
    %v81 = vld [vmem:[#allocation5 + $0x130] sm:$0xff]
    %v82 = vld [vmem:[#allocation5 + $0x138] sm:$0xff]
    %v83 = vld [vmem:[#allocation5 + $0x140] sm:$0xff]
    %v84 = vld [vmem:[#allocation5 + $0x148] sm:$0xff]
    %v85 = vld [vmem:[#allocation5 + $0x150] sm:$0xff]
    %v86 = vld [vmem:[#allocation5 + $0x158] sm:$0xff]
    %v87 = vld [vmem:[#allocation5 + $0x160] sm:$0xff]
    %v88 = vld [vmem:[#allocation5 + $0x168] sm:$0xff]
    %v89 = vld [vmem:[#allocation5 + $0x170] sm:$0xff]
    %v90 = vld [vmem:[#allocation5 + $0x178] sm:$0xff]
    %v91 = vld [vmem:[#allocation5 + $0x180] sm:$0xff]
    %v92 = vld [vmem:[#allocation5 + $0x188] sm:$0xff]
    %v93 = vld [vmem:[#allocation5 + $0x190] sm:$0xff]
    %v94 = vld [vmem:[#allocation5 + $0x198] sm:$0xff]
    %v95 = vld [vmem:[#allocation5 + $0x1a0] sm:$0xff]
    %v96 = vld [vmem:[#allocation5 + $0x1a8] sm:$0xff]
    %v97 = vld [vmem:[#allocation5 + $0x1b0] sm:$0xff]
    %v98 = vld [vmem:[#allocation5 + $0x1b8] sm:$0xff]
    %v99 = vld [vmem:[#allocation5 + $0x1c0] sm:$0xff]
    %v100 = vld [vmem:[#allocation5 + $0x1c8] sm:$0xff]
    %v101 = vld [vmem:[#allocation5 + $0x1d0] sm:$0xff]
    %v102 = vld [vmem:[#allocation5 + $0x1d8] sm:$0xff]
    %v103 = vld [vmem:[#allocation5 + $0x1e0] sm:$0xff]
    %v104 = vld [vmem:[#allocation5 + $0x1e8] sm:$0xff]
    %v105 = vld [vmem:[#allocation5 + $0x1f0] sm:$0xff]
    %v106 = vld [vmem:[#allocation5 + $0x1f8] sm:$0xff]
    %v107 = vld [vmem:[#allocation5 + $0x200] sm:$0xff]
    %v108 = vld [vmem:[#allocation5 + $0x208] sm:$0xff]
    %v109 = vld [vmem:[#allocation5 + $0x210] sm:$0xff]
    %v110 = vld [vmem:[#allocation5 + $0x218] sm:$0xff]
    %v111 = vld [vmem:[#allocation5 + $0x220] sm:$0xff]
    %v112 = vld [vmem:[#allocation5 + $0x228] sm:$0xff]
    %v113 = vld [vmem:[#allocation5 + $0x230] sm:$0xff]
    %v114 = vld [vmem:[#allocation5 + $0x238] sm:$0xff]
    %v115 = vld [vmem:[#allocation5 + $0x240] sm:$0xff]
    %v116 = vld [vmem:[#allocation5 + $0x248] sm:$0xff]
    %v117 = vld [vmem:[#allocation5 + $0x250] sm:$0xff]
    %v118 = vld [vmem:[#allocation5 + $0x258] sm:$0xff]
    %v119 = vld [vmem:[#allocation5 + $0x260] sm:$0xff]
    %v120 = vld [vmem:[#allocation5 + $0x268] sm:$0xff]
    %v121 = vld [vmem:[#allocation5 + $0x270] sm:$0xff]
    %v122 = vld [vmem:[#allocation5 + $0x278] sm:$0xff]
    %v123 = vld [vmem:[#allocation5 + $0x280] sm:$0xff]
    %v124 = vld [vmem:[#allocation5 + $0x288] sm:$0xff]
    %v125 = vld [vmem:[#allocation5 + $0x290] sm:$0xff]
    %v126 = vld [vmem:[#allocation5 + $0x298] sm:$0xff]
    %v127 = vld [vmem:[#allocation5 + $0x2a0] sm:$0xff]
    %v128 = vld [vmem:[#allocation5 + $0x2a8] sm:$0xff]
    %v129 = vld [vmem:[#allocation5 + $0x2b0] sm:$0xff]
    %v130 = vld [vmem:[#allocation5 + $0x2b8] sm:$0xff]
    %v131 = vld [vmem:[#allocation5 + $0x2c0] sm:$0xff]
    %v132 = vld [vmem:[#allocation5 + $0x2c8] sm:$0xff]
    %v133 = vld [vmem:[#allocation5 + $0x2d0] sm:$0xff]
    %v134 = vld [vmem:[#allocation5 + $0x2d8] sm:$0xff]
    %v135 = vld [vmem:[#allocation5 + $0x2e0] sm:$0xff]
    %v136 = vld [vmem:[#allocation5 + $0x2e8] sm:$0xff]
    %v137 = vld [vmem:[#allocation5 + $0x2f0] sm:$0xff]
    %v138 = vld [vmem:[#allocation5 + $0x2f8] sm:$0xff]
    %v139 = vld [vmem:[#allocation5 + $0x300] sm:$0xff]
    %v140 = vld [vmem:[#allocation5 + $0x308] sm:$0xff]
    %v141 = vld [vmem:[#allocation5 + $0x310] sm:$0xff]
    %v142 = vld [vmem:[#allocation5 + $0x318] sm:$0xff]
    %v143 = vld [vmem:[#allocation5 + $0x320] sm:$0xff]
    %v144 = vld [vmem:[#allocation5 + $0x328] sm:$0xff]
    %v145 = vld [vmem:[#allocation5 + $0x330] sm:$0xff]
    %v146 = vld [vmem:[#allocation5 + $0x338] sm:$0xff]
    %v147 = vld [vmem:[#allocation5 + $0x340] sm:$0xff]
    %v148 = vld [vmem:[#allocation5 + $0x348] sm:$0xff]
    %v149 = vld [vmem:[#allocation5 + $0x350] sm:$0xff]
    %v150 = vld [vmem:[#allocation5 + $0x358] sm:$0xff]
    %v151 = vld [vmem:[#allocation5 + $0x360] sm:$0xff]
    %v152 = vld [vmem:[#allocation5 + $0x368] sm:$0xff]
    %v153 = vld [vmem:[#allocation5 + $0x370] sm:$0xff]
    %v154 = vld [vmem:[#allocation5 + $0x378] sm:$0xff]
    %v155 = vld [vmem:[#allocation5 + $0x380] sm:$0xff]
    %v156 = vld [vmem:[#allocation5 + $0x388] sm:$0xff]
    %v157 = vld [vmem:[#allocation5 + $0x390] sm:$0xff]
    %v158 = vld [vmem:[#allocation5 + $0x398] sm:$0xff]
    %v159 = vld [vmem:[#allocation5 + $0x3a0] sm:$0xff]
    %v160 = vld [vmem:[#allocation5 + $0x3a8] sm:$0xff]
    %v161 = vld [vmem:[#allocation5 + $0x3b0] sm:$0xff]
    %v162 = vld [vmem:[#allocation5 + $0x3b8] sm:$0xff]
    %v163 = vld [vmem:[#allocation5 + $0x3c0] sm:$0xff]
    %v164 = vld [vmem:[#allocation5 + $0x3c8] sm:$0xff]
    %v165 = vld [vmem:[#allocation5 + $0x3d0] sm:$0xff]
    %v166 = vld [vmem:[#allocation5 + $0x3d8] sm:$0xff]
    %v167 = vld [vmem:[#allocation5 + $0x3e0] sm:$0xff]
    %v168 = vld [vmem:[#allocation5 + $0x3e8] sm:$0xff]
    %v169 = vld [vmem:[#allocation5 + $0x3f0] sm:$0xff]
    %v170 = vld [vmem:[#allocation5 + $0x3f8] sm:$0xff]
    %v171 = vld [vmem:[%s2] sm:$0x3]
    %v173 = vlaneseq
    %v174 = vshrl.u32 %v173, 7
    %v175 = vsub.s32 0, %v174
    %v176 = vrot.slane %v171, %v175
    %v177 = vlaneseq
    %v178 = vshrl.u32 %v177, 7
    %v179 = vsub.s32 1, %v178
    %v180 = vrot.slane %v171, %v179
    %v185 = vcombine.high %v41, %v41
    %v187 = vunpack.c.l.s4 1983009808
    %v188 = vunpack.c.0.s8 %v187
    %v189 = vlaneseq
    %v190 = vshrl.u32 %v189, 7
    %v191 = vsub.s32 %v188, %v190
    %v192 = vrot.slane %v41, %v191
    %v194 = vunpack.c.l.s4 1983009808
    %v195 = vunpack.c.0.s8 %v194
    %v196 = vlaneseq
    %v197 = vshrl.u32 %v196, 7
    %v198 = vsub.s32 %v195, %v197
    %v199 = vrot.slane %v185, %v198
    %v200 = vcombine.high %v192, %v192
    %v201 = vcombine.high %v199, %v199
    %v202 = vcombine.high %v42, %v42
    %v204 = vunpack.c.l.s4 1983009808
    %v205 = vunpack.c.0.s8 %v204
    %v206 = vlaneseq
    %v207 = vshrl.u32 %v206, 7
    %v208 = vsub.s32 %v205, %v207
    %v209 = vrot.slane %v42, %v208
    %v211 = vunpack.c.l.s4 1983009808
    %v212 = vunpack.c.0.s8 %v211
    %v213 = vlaneseq
    %v214 = vshrl.u32 %v213, 7
    %v215 = vsub.s32 %v212, %v214
    %v216 = vrot.slane %v202, %v215
    %v217 = vcombine.high %v209, %v209
    %v218 = vcombine.high %v216, %v216
    %v355 = vunpack.c.l.b16 %v43
    %v356 = vunpack.c.h.b16 %v43
    %v357 = vunpack.c.l.b16 %v44
    %v358 = vunpack.c.h.b16 %v44
    %v359 = vunpack.c.l.b16 %v45
    %v360 = vunpack.c.h.b16 %v45
    %v361 = vunpack.c.l.b16 %v46
    %v362 = vunpack.c.h.b16 %v46
    %v363 = vunpack.c.l.b16 %v47
    %v364 = vunpack.c.h.b16 %v47
    %v365 = vunpack.c.l.b16 %v48
    %v366 = vunpack.c.h.b16 %v48
    %v367 = vunpack.c.l.b16 %v49
    %v368 = vunpack.c.h.b16 %v49
    %v369 = vunpack.c.l.b16 %v50
    %v370 = vunpack.c.h.b16 %v50
    %v371 = vunpack.c.l.b16 %v51
    %v372 = vunpack.c.h.b16 %v51
    %v373 = vunpack.c.l.b16 %v52
    %v374 = vunpack.c.h.b16 %v52
    %v375 = vunpack.c.l.b16 %v53
    %v376 = vunpack.c.h.b16 %v53
    %v377 = vunpack.c.l.b16 %v54
    %v378 = vunpack.c.h.b16 %v54
    %v379 = vunpack.c.l.b16 %v55
    %v380 = vunpack.c.h.b16 %v55
    %v381 = vunpack.c.l.b16 %v56
    %v382 = vunpack.c.h.b16 %v56
    %v383 = vunpack.c.l.b16 %v57
    %v384 = vunpack.c.h.b16 %v57
    %v385 = vunpack.c.l.b16 %v58
    %v386 = vunpack.c.h.b16 %v58
    %v387 = vunpack.c.l.b16 %v59
    %v388 = vunpack.c.h.b16 %v59
    %v389 = vunpack.c.l.b16 %v60
    %v390 = vunpack.c.h.b16 %v60
    %v391 = vunpack.c.l.b16 %v61
    %v392 = vunpack.c.h.b16 %v61
    %v393 = vunpack.c.l.b16 %v62
    %v394 = vunpack.c.h.b16 %v62
    %v395 = vunpack.c.l.b16 %v63
    %v396 = vunpack.c.h.b16 %v63
    %v397 = vunpack.c.l.b16 %v64
    %v398 = vunpack.c.h.b16 %v64
    %v399 = vunpack.c.l.b16 %v65
    %v400 = vunpack.c.h.b16 %v65
    %v401 = vunpack.c.l.b16 %v66
    %v402 = vunpack.c.h.b16 %v66
    %v403 = vunpack.c.l.b16 %v67
    %v404 = vunpack.c.h.b16 %v67
    %v405 = vunpack.c.l.b16 %v68
    %v406 = vunpack.c.h.b16 %v68
    %v407 = vunpack.c.l.b16 %v69
    %v408 = vunpack.c.h.b16 %v69
    %v409 = vunpack.c.l.b16 %v70
    %v410 = vunpack.c.h.b16 %v70
    %v411 = vunpack.c.l.b16 %v71
    %v412 = vunpack.c.h.b16 %v71
    %v413 = vunpack.c.l.b16 %v72
    %v414 = vunpack.c.h.b16 %v72
    %v415 = vunpack.c.l.b16 %v73
    %v416 = vunpack.c.h.b16 %v73
    %v417 = vunpack.c.l.b16 %v74
    %v418 = vunpack.c.h.b16 %v74
    %v419 = vunpack.c.l.b16 %v75
    %v420 = vunpack.c.h.b16 %v75
    %v421 = vunpack.c.l.b16 %v76
    %v422 = vunpack.c.h.b16 %v76
    %v423 = vunpack.c.l.b16 %v77
    %v424 = vunpack.c.h.b16 %v77
    %v425 = vunpack.c.l.b16 %v78
    %v426 = vunpack.c.h.b16 %v78
    %v427 = vunpack.c.l.b16 %v79
    %v428 = vunpack.c.h.b16 %v79
    %v429 = vunpack.c.l.b16 %v80
    %v430 = vunpack.c.h.b16 %v80
    %v431 = vunpack.c.l.b16 %v81
    %v432 = vunpack.c.h.b16 %v81
    %v433 = vunpack.c.l.b16 %v82
    %v434 = vunpack.c.h.b16 %v82
    %v435 = vunpack.c.l.b16 %v83
    %v436 = vunpack.c.h.b16 %v83
    %v437 = vunpack.c.l.b16 %v84
    %v438 = vunpack.c.h.b16 %v84
    %v439 = vunpack.c.l.b16 %v85
    %v440 = vunpack.c.h.b16 %v85
    %v441 = vunpack.c.l.b16 %v86
    %v442 = vunpack.c.h.b16 %v86
    %v443 = vunpack.c.l.b16 %v87
    %v444 = vunpack.c.h.b16 %v87
    %v445 = vunpack.c.l.b16 %v88
    %v446 = vunpack.c.h.b16 %v88
    %v447 = vunpack.c.l.b16 %v89
    %v448 = vunpack.c.h.b16 %v89
    %v449 = vunpack.c.l.b16 %v90
    %v450 = vunpack.c.h.b16 %v90
    %v451 = vunpack.c.l.b16 %v91
    %v452 = vunpack.c.h.b16 %v91
    %v453 = vunpack.c.l.b16 %v92
    %v454 = vunpack.c.h.b16 %v92
    %v455 = vunpack.c.l.b16 %v93
    %v456 = vunpack.c.h.b16 %v93
    %v457 = vunpack.c.l.b16 %v94
    %v458 = vunpack.c.h.b16 %v94
    %v459 = vunpack.c.l.b16 %v95
    %v460 = vunpack.c.h.b16 %v95
    %v461 = vunpack.c.l.b16 %v96
    %v462 = vunpack.c.h.b16 %v96
    %v463 = vunpack.c.l.b16 %v97
    %v464 = vunpack.c.h.b16 %v97
    %v465 = vunpack.c.l.b16 %v98
    %v466 = vunpack.c.h.b16 %v98
    %v467 = vunpack.c.l.b16 %v99
    %v468 = vunpack.c.h.b16 %v99
    %v469 = vunpack.c.l.b16 %v100
    %v470 = vunpack.c.h.b16 %v100
    %v471 = vunpack.c.l.b16 %v101
    %v472 = vunpack.c.h.b16 %v101
    %v473 = vunpack.c.l.b16 %v102
    %v474 = vunpack.c.h.b16 %v102
    %v475 = vunpack.c.l.b16 %v103
    %v476 = vunpack.c.h.b16 %v103
    %v477 = vunpack.c.l.b16 %v104
    %v478 = vunpack.c.h.b16 %v104
    %v479 = vunpack.c.l.b16 %v105
    %v480 = vunpack.c.h.b16 %v105
    %v481 = vunpack.c.l.b16 %v106
    %v482 = vunpack.c.h.b16 %v106
    %v483 = vunpack.c.l.b16 %v107
    %v484 = vunpack.c.h.b16 %v107
    %v485 = vunpack.c.l.b16 %v108
    %v486 = vunpack.c.h.b16 %v108
    %v487 = vunpack.c.l.b16 %v109
    %v488 = vunpack.c.h.b16 %v109
    %v489 = vunpack.c.l.b16 %v110
    %v490 = vunpack.c.h.b16 %v110
    %v491 = vunpack.c.l.b16 %v111
    %v492 = vunpack.c.h.b16 %v111
    %v493 = vunpack.c.l.b16 %v112
    %v494 = vunpack.c.h.b16 %v112
    %v495 = vunpack.c.l.b16 %v113
    %v496 = vunpack.c.h.b16 %v113
    %v497 = vunpack.c.l.b16 %v114
    %v498 = vunpack.c.h.b16 %v114
    %v499 = vunpack.c.l.b16 %v115
    %v500 = vunpack.c.h.b16 %v115
    %v501 = vunpack.c.l.b16 %v116
    %v502 = vunpack.c.h.b16 %v116
    %v503 = vunpack.c.l.b16 %v117
    %v504 = vunpack.c.h.b16 %v117
    %v505 = vunpack.c.l.b16 %v118
    %v506 = vunpack.c.h.b16 %v118
    %v507 = vunpack.c.l.b16 %v119
    %v508 = vunpack.c.h.b16 %v119
    %v509 = vunpack.c.l.b16 %v120
    %v510 = vunpack.c.h.b16 %v120
    %v511 = vunpack.c.l.b16 %v121
    %v512 = vunpack.c.h.b16 %v121
    %v513 = vunpack.c.l.b16 %v122
    %v514 = vunpack.c.h.b16 %v122
    %v515 = vunpack.c.l.b16 %v123
    %v516 = vunpack.c.h.b16 %v123
    %v517 = vunpack.c.l.b16 %v124
    %v518 = vunpack.c.h.b16 %v124
    %v519 = vunpack.c.l.b16 %v125
    %v520 = vunpack.c.h.b16 %v125
    %v521 = vunpack.c.l.b16 %v126
    %v522 = vunpack.c.h.b16 %v126
    %v523 = vunpack.c.l.b16 %v127
    %v524 = vunpack.c.h.b16 %v127
    %v525 = vunpack.c.l.b16 %v128
    %v526 = vunpack.c.h.b16 %v128
    %v527 = vunpack.c.l.b16 %v129
    %v528 = vunpack.c.h.b16 %v129
    %v529 = vunpack.c.l.b16 %v130
    %v530 = vunpack.c.h.b16 %v130
    %v531 = vunpack.c.l.b16 %v131
    %v532 = vunpack.c.h.b16 %v131
    %v533 = vunpack.c.l.b16 %v132
    %v534 = vunpack.c.h.b16 %v132
    %v535 = vunpack.c.l.b16 %v133
    %v536 = vunpack.c.h.b16 %v133
    %v537 = vunpack.c.l.b16 %v134
    %v538 = vunpack.c.h.b16 %v134
    %v539 = vunpack.c.l.b16 %v135
    %v540 = vunpack.c.h.b16 %v135
    %v541 = vunpack.c.l.b16 %v136
    %v542 = vunpack.c.h.b16 %v136
    %v543 = vunpack.c.l.b16 %v137
    %v544 = vunpack.c.h.b16 %v137
    %v545 = vunpack.c.l.b16 %v138
    %v546 = vunpack.c.h.b16 %v138
    %v547 = vunpack.c.l.b16 %v139
    %v548 = vunpack.c.h.b16 %v139
    %v549 = vunpack.c.l.b16 %v140
    %v550 = vunpack.c.h.b16 %v140
    %v551 = vunpack.c.l.b16 %v141
    %v552 = vunpack.c.h.b16 %v141
    %v553 = vunpack.c.l.b16 %v142
    %v554 = vunpack.c.h.b16 %v142
    %v555 = vunpack.c.l.b16 %v143
    %v556 = vunpack.c.h.b16 %v143
    %v557 = vunpack.c.l.b16 %v144
    %v558 = vunpack.c.h.b16 %v144
    %v559 = vunpack.c.l.b16 %v145
    %v560 = vunpack.c.h.b16 %v145
    %v561 = vunpack.c.l.b16 %v146
    %v562 = vunpack.c.h.b16 %v146
    %v563 = vunpack.c.l.b16 %v147
    %v564 = vunpack.c.h.b16 %v147
    %v565 = vunpack.c.l.b16 %v148
    %v566 = vunpack.c.h.b16 %v148
    %v567 = vunpack.c.l.b16 %v149
    %v568 = vunpack.c.h.b16 %v149
    %v569 = vunpack.c.l.b16 %v150
    %v570 = vunpack.c.h.b16 %v150
    %v571 = vunpack.c.l.b16 %v151
    %v572 = vunpack.c.h.b16 %v151
    %v573 = vunpack.c.l.b16 %v152
    %v574 = vunpack.c.h.b16 %v152
    %v575 = vunpack.c.l.b16 %v153
    %v576 = vunpack.c.h.b16 %v153
    %v577 = vunpack.c.l.b16 %v154
    %v578 = vunpack.c.h.b16 %v154
    %v579 = vunpack.c.l.b16 %v155
    %v580 = vunpack.c.h.b16 %v155
    %v581 = vunpack.c.l.b16 %v156
    %v582 = vunpack.c.h.b16 %v156
    %v583 = vunpack.c.l.b16 %v157
    %v584 = vunpack.c.h.b16 %v157
    %v585 = vunpack.c.l.b16 %v158
    %v586 = vunpack.c.h.b16 %v158
    %v587 = vunpack.c.l.b16 %v159
    %v588 = vunpack.c.h.b16 %v159
    %v589 = vunpack.c.l.b16 %v160
    %v590 = vunpack.c.h.b16 %v160
    %v591 = vunpack.c.l.b16 %v161
    %v592 = vunpack.c.h.b16 %v161
    %v593 = vunpack.c.l.b16 %v162
    %v594 = vunpack.c.h.b16 %v162
    %v595 = vunpack.c.l.b16 %v163
    %v596 = vunpack.c.h.b16 %v163
    %v597 = vunpack.c.l.b16 %v164
    %v598 = vunpack.c.h.b16 %v164
    %v599 = vunpack.c.l.b16 %v165
    %v600 = vunpack.c.h.b16 %v165
    %v601 = vunpack.c.l.b16 %v166
    %v602 = vunpack.c.h.b16 %v166
    %v603 = vunpack.c.l.b16 %v167
    %v604 = vunpack.c.h.b16 %v167
    %v605 = vunpack.c.l.b16 %v168
    %v606 = vunpack.c.h.b16 %v168
    %v607 = vunpack.c.l.b16 %v169
    %v608 = vunpack.c.h.b16 %v169
    %v609 = vunpack.c.l.b16 %v170
    %v610 = vunpack.c.h.b16 %v170
    %v611 = vpack.c.b16 %v357, %v355
    %v612 = vpack.c.b16 %v358, %v356
    %v613 = vpack.c.b16 %v361, %v359
    %v614 = vpack.c.b16 %v362, %v360
    %v615 = vpack.c.b16 %v365, %v363
    %v616 = vpack.c.b16 %v366, %v364
    %v617 = vpack.c.b16 %v369, %v367
    %v618 = vpack.c.b16 %v370, %v368
    %v619 = vpack.c.b16 %v373, %v371
    %v620 = vpack.c.b16 %v374, %v372
    %v621 = vpack.c.b16 %v377, %v375
    %v622 = vpack.c.b16 %v378, %v376
    %v623 = vpack.c.b16 %v381, %v379
    %v624 = vpack.c.b16 %v382, %v380
    %v625 = vpack.c.b16 %v385, %v383
    %v626 = vpack.c.b16 %v386, %v384
    %v627 = vpack.c.b16 %v389, %v387
    %v628 = vpack.c.b16 %v390, %v388
    %v629 = vpack.c.b16 %v393, %v391
    %v630 = vpack.c.b16 %v394, %v392
    %v631 = vpack.c.b16 %v397, %v395
    %v632 = vpack.c.b16 %v398, %v396
    %v633 = vpack.c.b16 %v401, %v399
    %v634 = vpack.c.b16 %v402, %v400
    %v635 = vpack.c.b16 %v405, %v403
    %v636 = vpack.c.b16 %v406, %v404
    %v637 = vpack.c.b16 %v409, %v407
    %v638 = vpack.c.b16 %v410, %v408
    %v639 = vpack.c.b16 %v413, %v411
    %v640 = vpack.c.b16 %v414, %v412
    %v641 = vpack.c.b16 %v417, %v415
    %v642 = vpack.c.b16 %v418, %v416
    %v643 = vpack.c.b16 %v421, %v419
    %v644 = vpack.c.b16 %v422, %v420
    %v645 = vpack.c.b16 %v425, %v423
    %v646 = vpack.c.b16 %v426, %v424
    %v647 = vpack.c.b16 %v429, %v427
    %v648 = vpack.c.b16 %v430, %v428
    %v649 = vpack.c.b16 %v433, %v431
    %v650 = vpack.c.b16 %v434, %v432
    %v651 = vpack.c.b16 %v437, %v435
    %v652 = vpack.c.b16 %v438, %v436
    %v653 = vpack.c.b16 %v441, %v439
    %v654 = vpack.c.b16 %v442, %v440
    %v655 = vpack.c.b16 %v445, %v443
    %v656 = vpack.c.b16 %v446, %v444
    %v657 = vpack.c.b16 %v449, %v447
    %v658 = vpack.c.b16 %v450, %v448
    %v659 = vpack.c.b16 %v453, %v451
    %v660 = vpack.c.b16 %v454, %v452
    %v661 = vpack.c.b16 %v457, %v455
    %v662 = vpack.c.b16 %v458, %v456
    %v663 = vpack.c.b16 %v461, %v459
    %v664 = vpack.c.b16 %v462, %v460
    %v665 = vpack.c.b16 %v465, %v463
    %v666 = vpack.c.b16 %v466, %v464
    %v667 = vpack.c.b16 %v469, %v467
    %v668 = vpack.c.b16 %v470, %v468
    %v669 = vpack.c.b16 %v473, %v471
    %v670 = vpack.c.b16 %v474, %v472
    %v671 = vpack.c.b16 %v477, %v475
    %v672 = vpack.c.b16 %v478, %v476
    %v673 = vpack.c.b16 %v481, %v479
    %v674 = vpack.c.b16 %v482, %v480
    %v675 = vpack.c.b16 %v485, %v483
    %v676 = vpack.c.b16 %v486, %v484
    %v677 = vpack.c.b16 %v489, %v487
    %v678 = vpack.c.b16 %v490, %v488
    %v679 = vpack.c.b16 %v493, %v491
    %v680 = vpack.c.b16 %v494, %v492
    %v681 = vpack.c.b16 %v497, %v495
    %v682 = vpack.c.b16 %v498, %v496
    %v683 = vpack.c.b16 %v501, %v499
    %v684 = vpack.c.b16 %v502, %v500
    %v685 = vpack.c.b16 %v505, %v503
    %v686 = vpack.c.b16 %v506, %v504
    %v687 = vpack.c.b16 %v509, %v507
    %v688 = vpack.c.b16 %v510, %v508
    %v689 = vpack.c.b16 %v513, %v511
    %v690 = vpack.c.b16 %v514, %v512
    %v691 = vpack.c.b16 %v517, %v515
    %v692 = vpack.c.b16 %v518, %v516
    %v693 = vpack.c.b16 %v521, %v519
    %v694 = vpack.c.b16 %v522, %v520
    %v695 = vpack.c.b16 %v525, %v523
    %v696 = vpack.c.b16 %v526, %v524
    %v697 = vpack.c.b16 %v529, %v527
    %v698 = vpack.c.b16 %v530, %v528
    %v699 = vpack.c.b16 %v533, %v531
    %v700 = vpack.c.b16 %v534, %v532
    %v701 = vpack.c.b16 %v537, %v535
    %v702 = vpack.c.b16 %v538, %v536
    %v703 = vpack.c.b16 %v541, %v539
    %v704 = vpack.c.b16 %v542, %v540
    %v705 = vpack.c.b16 %v545, %v543
    %v706 = vpack.c.b16 %v546, %v544
    %v707 = vpack.c.b16 %v549, %v547
    %v708 = vpack.c.b16 %v550, %v548
    %v709 = vpack.c.b16 %v553, %v551
    %v710 = vpack.c.b16 %v554, %v552
    %v711 = vpack.c.b16 %v557, %v555
    %v712 = vpack.c.b16 %v558, %v556
    %v713 = vpack.c.b16 %v561, %v559
    %v714 = vpack.c.b16 %v562, %v560
    %v715 = vpack.c.b16 %v565, %v563
    %v716 = vpack.c.b16 %v566, %v564
    %v717 = vpack.c.b16 %v569, %v567
    %v718 = vpack.c.b16 %v570, %v568
    %v719 = vpack.c.b16 %v573, %v571
    %v720 = vpack.c.b16 %v574, %v572
    %v721 = vpack.c.b16 %v577, %v575
    %v722 = vpack.c.b16 %v578, %v576
    %v723 = vpack.c.b16 %v581, %v579
    %v724 = vpack.c.b16 %v582, %v580
    %v725 = vpack.c.b16 %v585, %v583
    %v726 = vpack.c.b16 %v586, %v584
    %v727 = vpack.c.b16 %v589, %v587
    %v728 = vpack.c.b16 %v590, %v588
    %v729 = vpack.c.b16 %v593, %v591
    %v730 = vpack.c.b16 %v594, %v592
    %v731 = vpack.c.b16 %v597, %v595
    %v732 = vpack.c.b16 %v598, %v596
    %v733 = vpack.c.b16 %v601, %v599
    %v734 = vpack.c.b16 %v602, %v600
    %v735 = vpack.c.b16 %v605, %v603
    %v736 = vpack.c.b16 %v606, %v604
    %v737 = vpack.c.b16 %v609, %v607
    %v738 = vpack.c.b16 %v610, %v608
    %867 = vmatprep.subr.bf16.mxu0 %v626
    %868 = vmatpush1.bf16.msra.mxu0 %v625
    %869 = vmatprep.subr.bf16.mxu0 %v624
    %870 = vmatpush1.bf16.msra.mxu0 %v623
    %871 = vmatprep.subr.bf16.mxu0 %v622
    %872 = vmatpush1.bf16.msra.mxu0 %v621
    %873 = vmatprep.subr.bf16.mxu0 %v620
    %874 = vmatpush1.bf16.msra.mxu0 %v619
    %875 = vmatprep.subr.bf16.mxu0 %v618
    %876 = vmatpush1.bf16.msra.mxu0 %v617
    %877 = vmatprep.subr.bf16.mxu0 %v616
    %878 = vmatpush1.bf16.msra.mxu0 %v615
    %879 = vmatprep.subr.bf16.mxu0 %v614
    %880 = vmatpush1.bf16.msra.mxu0 %v613
    %881 = vmatprep.subr.bf16.mxu0 %v612
    %882 = vmatpush1.bf16.msra.mxu0 %v611
    %883 = vmatprep.subr.bf16.mxu0 %v642
    %884 = vmatpush2.bf16.msra.mxu0 %v641
    %885 = vmatprep.subr.bf16.mxu0 %v640
    %886 = vmatpush2.bf16.msra.mxu0 %v639
    %887 = vmatprep.subr.bf16.mxu0 %v638
    %888 = vmatpush2.bf16.msra.mxu0 %v637
    %889 = vmatprep.subr.bf16.mxu0 %v636
    %890 = vmatpush2.bf16.msra.mxu0 %v635
    %891 = vmatprep.subr.bf16.mxu0 %v634
    %892 = vmatpush2.bf16.msra.mxu0 %v633
    %893 = vmatprep.subr.bf16.mxu0 %v632
    %894 = vmatpush2.bf16.msra.mxu0 %v631
    %895 = vmatprep.subr.bf16.mxu0 %v630
    %896 = vmatpush2.bf16.msra.mxu0 %v629
    %897 = vmatprep.subr.bf16.mxu0 %v628
    %898 = vmatpush2.bf16.msra.mxu0 %v627
    %899 = vmatprep.mubr.bf16.mxu0 %v200
    %900 = vmatmul.mubr.bf16.gmra.mxu0 %v192
    %v901 = vpop.f32.mrf.mxu0
    %v902 = vadd.f32 %v176, %v901
    %v903 = vpop.f32.mrf.mxu0
    %v904 = vadd.f32 %v180, %v903
    %v905 = vpop.f32.mrf.mxu0
    %v906 = vpop.f32.mrf.mxu0
    %907 = vdwg.mxu0
    %908 = vmatprep.subr.bf16.mxu0 %v658
    %909 = vmatpush1.bf16.msra.mxu0 %v657
    %910 = vmatprep.subr.bf16.mxu0 %v656
    %911 = vmatpush1.bf16.msra.mxu0 %v655
    %912 = vmatprep.subr.bf16.mxu0 %v654
    %913 = vmatpush1.bf16.msra.mxu0 %v653
    %914 = vmatprep.subr.bf16.mxu0 %v652
    %915 = vmatpush1.bf16.msra.mxu0 %v651
    %916 = vmatprep.subr.bf16.mxu0 %v650
    %917 = vmatpush1.bf16.msra.mxu0 %v649
    %918 = vmatprep.subr.bf16.mxu0 %v648
    %919 = vmatpush1.bf16.msra.mxu0 %v647
    %920 = vmatprep.subr.bf16.mxu0 %v646
    %921 = vmatpush1.bf16.msra.mxu0 %v645
    %922 = vmatprep.subr.bf16.mxu0 %v644
    %923 = vmatpush1.bf16.msra.mxu0 %v643
    %924 = vmatprep.subr.bf16.mxu0 %v674
    %925 = vmatpush2.bf16.msra.mxu0 %v673
    %926 = vmatprep.subr.bf16.mxu0 %v672
    %927 = vmatpush2.bf16.msra.mxu0 %v671
    %928 = vmatprep.subr.bf16.mxu0 %v670
    %929 = vmatpush2.bf16.msra.mxu0 %v669
    %930 = vmatprep.subr.bf16.mxu0 %v668
    %931 = vmatpush2.bf16.msra.mxu0 %v667
    %932 = vmatprep.subr.bf16.mxu0 %v666
    %933 = vmatpush2.bf16.msra.mxu0 %v665
    %934 = vmatprep.subr.bf16.mxu0 %v664
    %935 = vmatpush2.bf16.msra.mxu0 %v663
    %936 = vmatprep.subr.bf16.mxu0 %v662
    %937 = vmatpush2.bf16.msra.mxu0 %v661
    %938 = vmatprep.subr.bf16.mxu0 %v660
    %939 = vmatpush2.bf16.msra.mxu0 %v659
    %940 = vmatprep.mubr.bf16.mxu0 %v201
    %941 = vmatmul.mubr.bf16.gmra.mxu0 %v199
    %v942 = vpop.f32.mrf.mxu0
    %v943 = vadd.f32 %v902, %v942
    %v944 = vpop.f32.mrf.mxu0
    %v945 = vadd.f32 %v904, %v944
    %v946 = vpop.f32.mrf.mxu0
    %v947 = vpop.f32.mrf.mxu0
    %948 = vdwg.mxu0
    %949 = vmatprep.subr.bf16.mxu0 %v690
    %950 = vmatpush1.bf16.msra.mxu0 %v689
    %951 = vmatprep.subr.bf16.mxu0 %v688
    %952 = vmatpush1.bf16.msra.mxu0 %v687
    %953 = vmatprep.subr.bf16.mxu0 %v686
    %954 = vmatpush1.bf16.msra.mxu0 %v685
    %955 = vmatprep.subr.bf16.mxu0 %v684
    %956 = vmatpush1.bf16.msra.mxu0 %v683
    %957 = vmatprep.subr.bf16.mxu0 %v682
    %958 = vmatpush1.bf16.msra.mxu0 %v681
    %959 = vmatprep.subr.bf16.mxu0 %v680
    %960 = vmatpush1.bf16.msra.mxu0 %v679
    %961 = vmatprep.subr.bf16.mxu0 %v678
    %962 = vmatpush1.bf16.msra.mxu0 %v677
    %963 = vmatprep.subr.bf16.mxu0 %v676
    %964 = vmatpush1.bf16.msra.mxu0 %v675
    %965 = vmatprep.subr.bf16.mxu0 %v706
    %966 = vmatpush2.bf16.msra.mxu0 %v705
    %967 = vmatprep.subr.bf16.mxu0 %v704
    %968 = vmatpush2.bf16.msra.mxu0 %v703
    %969 = vmatprep.subr.bf16.mxu0 %v702
    %970 = vmatpush2.bf16.msra.mxu0 %v701
    %971 = vmatprep.subr.bf16.mxu0 %v700
    %972 = vmatpush2.bf16.msra.mxu0 %v699
    %973 = vmatprep.subr.bf16.mxu0 %v698
    %974 = vmatpush2.bf16.msra.mxu0 %v697
    %975 = vmatprep.subr.bf16.mxu0 %v696
    %976 = vmatpush2.bf16.msra.mxu0 %v695
    %977 = vmatprep.subr.bf16.mxu0 %v694
    %978 = vmatpush2.bf16.msra.mxu0 %v693
    %979 = vmatprep.subr.bf16.mxu0 %v692
    %980 = vmatpush2.bf16.msra.mxu0 %v691
    %981 = vmatprep.mubr.bf16.mxu0 %v217
    %982 = vmatmul.mubr.bf16.gmra.mxu0 %v209
    %v983 = vpop.f32.mrf.mxu0
    %v984 = vadd.f32 %v943, %v983
    %v985 = vpop.f32.mrf.mxu0
    %v986 = vadd.f32 %v945, %v985
    %v987 = vpop.f32.mrf.mxu0
    %v988 = vpop.f32.mrf.mxu0
    %989 = vdwg.mxu0
    %990 = vmatprep.subr.bf16.mxu0 %v722
    %991 = vmatpush1.bf16.msra.mxu0 %v721
    %992 = vmatprep.subr.bf16.mxu0 %v720
    %993 = vmatpush1.bf16.msra.mxu0 %v719
    %994 = vmatprep.subr.bf16.mxu0 %v718
    %995 = vmatpush1.bf16.msra.mxu0 %v717
    %996 = vmatprep.subr.bf16.mxu0 %v716
    %997 = vmatpush1.bf16.msra.mxu0 %v715
    %998 = vmatprep.subr.bf16.mxu0 %v714
    %999 = vmatpush1.bf16.msra.mxu0 %v713
    %1000 = vmatprep.subr.bf16.mxu0 %v712
    %1001 = vmatpush1.bf16.msra.mxu0 %v711
    %1002 = vmatprep.subr.bf16.mxu0 %v710
    %1003 = vmatpush1.bf16.msra.mxu0 %v709
    %1004 = vmatprep.subr.bf16.mxu0 %v708
    %1005 = vmatpush1.bf16.msra.mxu0 %v707
    %1006 = vmatprep.subr.bf16.mxu0 %v738
    %1007 = vmatpush2.bf16.msra.mxu0 %v737
    %1008 = vmatprep.subr.bf16.mxu0 %v736
    %1009 = vmatpush2.bf16.msra.mxu0 %v735
    %1010 = vmatprep.subr.bf16.mxu0 %v734
    %1011 = vmatpush2.bf16.msra.mxu0 %v733
    %1012 = vmatprep.subr.bf16.mxu0 %v732
    %1013 = vmatpush2.bf16.msra.mxu0 %v731
    %1014 = vmatprep.subr.bf16.mxu0 %v730
    %1015 = vmatpush2.bf16.msra.mxu0 %v729
    %1016 = vmatprep.subr.bf16.mxu0 %v728
    %1017 = vmatpush2.bf16.msra.mxu0 %v727
    %1018 = vmatprep.subr.bf16.mxu0 %v726
    %1019 = vmatpush2.bf16.msra.mxu0 %v725
    %1020 = vmatprep.subr.bf16.mxu0 %v724
    %1021 = vmatpush2.bf16.msra.mxu0 %v723
    %1022 = vmatprep.mubr.bf16.mxu0 %v218
    %1023 = vmatmul.mubr.bf16.gmra.mxu0 %v216
    %v1024 = vpop.f32.mrf.mxu0
    %v1025 = vadd.f32 %v984, %v1024
    %v1026 = vpop.f32.mrf.mxu0
    %v1027 = vadd.f32 %v986, %v1026
    %v1028 = vpop.f32.mrf.mxu0
    %v1029 = vpop.f32.mrf.mxu0
    %1030 = vdwg.mxu0
    %v1031 = vmul.f32 %v1025, %v1025
    %v1032 = vmul.f32 %v1027, %v1027
    %vm1033 = vcmask 1043456
    %v1034 = vsel %vm1033, %v1031, 0.0
    %v1035 = vsel %vm1033, %v1032, 0.0
    %v1036 = vadd.f32 %v1034, %v1035
    %1037 = vadd.xlane.f32.xlu0 %v1036
    %v1038 = vpop.xlane.xlu0 %1037
    %v1039 = vmax.f32 %v1038, 1e-24
    %v1040 = vrsqrt.pop %v1039
    %v1041 = vmul.f32 %v1025, %v1040
    %v1042 = vmul.f32 %v1027, %v1040
    %v1045 = vrot.slane %v1041, 2
    %v1046 = vrot.slane %v1042, 2
    %v1049 = vmul.f32 %v1041, %v1045
    %v1050 = vmul.f32 %v1042, %v1046
    %vm1051 = vcmask 1041408
    %v1052 = vsel %vm1051, %v1049, 0.0
    %v1053 = vsel %vm1051, %v1050, 0.0
    %v1054 = vadd.f32 %v1052, %v1053
    %1055 = vadd.xlane.f32.xlu0 %v1054
    %v1056 = vpop.xlane.xlu0 %1055
    %vm1057 = vcmask 1024
    %v1058 = vsel %vm1057, %v1056, 0.0
    %1059 = vadd.xlane.f32.xlu0 %v1058
    %v1060 = vpop.xlane.xlu0 %1059
    %v1061 = vrot.slane %v1060, 4
    %v1062 = vadd.f32 %v1060, %v1061
    %v1063 = vrot.slane %v1062, 2
    %v1064 = vadd.f32 %v1062, %v1063
    %v1065 = vrot.slane %v1064, 1
    %v1066 = vadd.f32 %v1064, %v1065
    %s1067 = vtos %v1066
    %v1068 = vrcp.pop 2.0
    %s1069 = vtos %v1068
    %s1070 = smul.f32 %s1067, %s1069
    %1071 = vmatprep.subr.mxu0 0.0
    %1072 = vmatpush1.xpose.msra.mxu0 0.0
    %1073 = vmatprep.subr.mxu0 0.0
    %1074 = vmatpush1.xpose.msra.mxu0 0.0
    %1075 = vmatprep.subr.mxu0 0.0
    %1076 = vmatpush1.xpose.msra.mxu0 0.0
    %1077 = vmatprep.subr.mxu0 0.0
    %1078 = vmatpush1.xpose.msra.mxu0 0.0
    %1079 = vmatprep.subr.mxu0 0.0
    %1080 = vmatpush1.xpose.msra.mxu0 0.0
    %1081 = vmatprep.subr.mxu0 0.0
    %1082 = vmatpush1.xpose.msra.mxu0 0.0
    %1083 = vmatprep.subr.mxu0 0.0
    %1084 = vmatpush1.xpose.msra.mxu0 0.0
    %1085 = vmatprep.subr.mxu0 0.0
    %1086 = vmatpush1.xpose.msra.mxu0 0.0
    %1087 = vmatprep.subr.mxu0 0.0
    %1088 = vmatpush1.xpose.msra.mxu0 0.0
    %1089 = vmatprep.subr.mxu0 0.0
    %1090 = vmatpush1.xpose.msra.mxu0 0.0
    %1091 = vmatprep.subr.mxu0 0.0
    %1092 = vmatpush1.xpose.msra.mxu0 0.0
    %1093 = vmatprep.subr.mxu0 0.0
    %1094 = vmatpush1.xpose.msra.mxu0 0.0
    %1095 = vmatprep.subr.mxu0 0.0
    %1096 = vmatpush1.xpose.msra.mxu0 0.0
    %1097 = vmatprep.subr.mxu0 0.0
    %1098 = vmatpush1.xpose.msra.mxu0 0.0
    %1099 = vmatprep.subr.mxu0 0.0
    %1100 = vmatpush1.xpose.msra.mxu0 0.0
    %1101 = vmatprep.subr.mxu0 %v1042
    %1102 = vmatpush1.xpose.msra.mxu0 %v1041
    %1103 = vmatprep.subr.mxu0 0.0
    %1104 = vmatpush2.xpose.msra.mxu0 0.0
    %1105 = vmatprep.subr.mxu0 0.0
    %1106 = vmatpush2.xpose.msra.mxu0 0.0
    %1107 = vmatprep.subr.mxu0 0.0
    %1108 = vmatpush2.xpose.msra.mxu0 0.0
    %1109 = vmatprep.subr.mxu0 0.0
    %1110 = vmatpush2.xpose.msra.mxu0 0.0
    %1111 = vmatprep.subr.mxu0 0.0
    %1112 = vmatpush2.xpose.msra.mxu0 0.0
    %1113 = vmatprep.subr.mxu0 0.0
    %1114 = vmatpush2.xpose.msra.mxu0 0.0
    %1115 = vmatprep.subr.mxu0 0.0
    %1116 = vmatpush2.xpose.msra.mxu0 0.0
    %1117 = vmatprep.subr.mxu0 0.0
    %1118 = vmatpush2.xpose.msra.mxu0 0.0
    %1119 = vmatprep.subr.mxu0 0.0
    %1120 = vmatpush2.xpose.msra.mxu0 0.0
    %1121 = vmatprep.subr.mxu0 0.0
    %1122 = vmatpush2.xpose.msra.mxu0 0.0
    %1123 = vmatprep.subr.mxu0 0.0
    %1124 = vmatpush2.xpose.msra.mxu0 0.0
    %1125 = vmatprep.subr.mxu0 0.0
    %1126 = vmatpush2.xpose.msra.mxu0 0.0
    %1127 = vmatprep.subr.mxu0 0.0
    %1128 = vmatpush2.xpose.msra.mxu0 0.0
    %1129 = vmatprep.subr.mxu0 0.0
    %1130 = vmatpush2.xpose.msra.mxu0 0.0
    %1131 = vmatprep.subr.mxu0 0.0
    %1132 = vmatpush2.xpose.msra.mxu0 0.0
    %1133 = vmatprep.subr.mxu0 0.0
    %1134 = vmatpush2.xpose.msra.mxu0 0.0
    %1135 = vmatprep.mubr.f32.mxu0 %v1042
    %1136 = vmatmul.mubr.f32.gmra.mxu0 %v1041
    %v1137 = vpop.f32.mrf.mxu0
    %v1138 = vadd.f32 0.0, %v1137
    %v1139 = vpop.f32.mrf.mxu0
    %1140 = vdwg.mxu0
    %v1141 = vsub.f32 %v1138, 1.0
    %v1142 = vmul.f32 %v1141, 10.0
    %v1143 = vmul.f32 %v1142, 1.442695
    %v1144 = vpow.pop %v1143
    %vm1145 = vcmask 27648
    %v1146 = vsel %vm1145, %v1144, 0.0
    %1147 = vadd.xlane.f32.xlu0 %v1146
    %v1148 = vpop.xlane.xlu0 %1147
    %v1149 = vsub.f32 %v1148, 1.0
    %v1150 = vlog2.pop %v1149
    %v1151 = vmul.f32 %v1150, 0.6931472
    %vm1152 = vcmask 3072
    %v1153 = vsel %vm1152, %v1151, 0.0
    %1154 = vadd.xlane.f32.xlu0 %v1153
    %v1155 = vpop.xlane.xlu0 %1154
    %v1156 = vrot.slane %v1155, 4
    %v1157 = vadd.f32 %v1155, %v1156
    %v1158 = vrot.slane %v1157, 2
    %v1159 = vadd.f32 %v1157, %v1158
    %v1160 = vrot.slane %v1159, 1
    %v1161 = vadd.f32 %v1159, %v1160
    %s1162 = vtos %v1161
    %v1163 = vrcp.pop 4.0
    %s1164 = vtos %v1163
    %s1165 = smul.f32 %s1162, %s1164
    %s1166 = ssub.f32 1.0, %s1070
    %s1167 = smul.f32 %s1166, 10.0
    %s1168 = sadd.f32 %s1165, %s1167
    %v1169 = vstv %s1168
    %1170 = vst [vmem:[#allocation7] sm:$0x1] %v1169
    // Predicated region
    $region22: #{tpu_custom_call.1} parent=1 // pred_check
      _
    $region23: #{tpu_custom_call.1} parent=1 // pred_check_branch
      %1172 = sbr.rel (0) target = $region25
    $region24: #{tpu_custom_call.1} parent=1 // pred_region
      %s1174 = ssub.s32 16, 16
      %1175 = vsyncadd [#allocation4], %s1174
      %s1177 = sshll.u32 [#allocation7], 4
      %s1178 = int_to_ptr.vmem [resolvable:$true] %s1177
      %1180 = dma.vmem_to_hbm [thread:$0]  %s1178, 16, %s3, [#allocation4]
    $region25: #{tpu_custom_call.1} parent=1 // pred_fallthru
      _
    // Predicated region
    $region26: #{tpu_custom_call.1} parent=1 // pred_check
      _
    $region27: #{tpu_custom_call.1} parent=1 // pred_check_branch
      %1182 = sbr.rel (0) target = $region29
    $region28: #{tpu_custom_call.1} parent=1 // pred_region
      %1183 = dma.done [#allocation4], 16
    $region29: #{tpu_custom_call.1} parent=1 // pred_fallthru
      _
    %1184 = vsyncpa [#allocation3], 1
    %1185 = vsyncpa [#allocation6], 1
    %1186 = vsyncpa [#allocation4], 1

</llo_original>
